<compile_context>
chip_gen: v7x
topology: tpu7x:2x2x1
jax: 0.10.0
libtpu: 0.0.40
codegen_flags: <defaults>
</compile_context>

<pallas_src>
import functools

import jax
import jax.numpy as jnp
from jax.experimental import pallas as pl
from jax.experimental.pallas import tpu as pltpu


def _round_up(x, m):
    return (x + m - 1) // m * m


# ---------------------------------------------------------------------------
# Fused (fully VMEM-resident) kernel: all layers in one shot.
# ---------------------------------------------------------------------------
def _gcn_fused_kernel(*refs, padded_dims, n_layers):
    """refs = (adj_ref, feat_ref, w0, b0, w1, b1, ..., out_ref)."""
    adj_ref, feat_ref = refs[0], refs[1]
    out_ref = refs[-1]
    wb_refs = refs[2:-1]

    adj = adj_ref[...]                     # [Np, Np], matmul dtype (bf16 default)
    mm_dtype = adj.dtype
    h = feat_ref[...]                      # [Np, F0p], f32

    for l in range(n_layers):              # static unroll (L is small)
        w = wb_refs[2 * l][...]            # [Fin_p, Fout_p], matmul dtype
        b = wb_refs[2 * l + 1][...]        # [1, Fout_p], f32
        fi_p, fo_p = padded_dims[l]

        h_mm = h.astype(mm_dtype)
        if fi_p <= fo_p:
            # Aggregate first: N²-sized matmul contracts over the smaller padded dim.
            agg = jnp.dot(adj, h_mm, preferred_element_type=jnp.float32)
            h = jnp.dot(agg.astype(mm_dtype), w,
                        preferred_element_type=jnp.float32)
        else:
            # Transform first.
            xw = jnp.dot(h_mm, w, preferred_element_type=jnp.float32)
            h = jnp.dot(adj, xw.astype(mm_dtype),
                        preferred_element_type=jnp.float32)

        h = h + b                          # f32 bias add (broadcast over nodes)
        if l != n_layers - 1:
            h = jnp.maximum(h, 0.0)        # ReLU on hidden layers only

    out_ref[...] = h.astype(out_ref.dtype)


# ---------------------------------------------------------------------------
# Tiled / streamed fallback path (per layer, two kernels).
# ---------------------------------------------------------------------------
def _xw_kernel(h_ref, w_ref, o_ref):
    """One row-tile of XW = H @ W (transform-first; no adj dependency)."""
    h = h_ref[...].astype(w_ref.dtype)
    o_ref[...] = jnp.dot(h, w_ref[...],
                         preferred_element_type=jnp.float32).astype(o_ref.dtype)


def _agg_kernel(adj_ref, xw_ref, b_ref, o_ref, acc_ref, *, apply_relu):
    """out[i-rows] = act(sum_k adj[i,k] @ xw[k] + b), accumulate over the k grid axis."""
    k = pl.program_id(1)

    @pl.when(k == 0)
    def _():
        acc_ref[...] = jnp.zeros_like(acc_ref)

    acc_ref[...] += jnp.dot(adj_ref[...], xw_ref[...],
                            preferred_element_type=jnp.float32)

    @pl.when(k == pl.num_programs(1) - 1)
    def _():
        h = acc_ref[...] + b_ref[...]
        if apply_relu:
            h = jnp.maximum(h, 0.0)
        o_ref[...] = h.astype(o_ref.dtype)


def _tiled_layer(adj_p, h_p, w_p, b_p, *, apply_relu, tm, tk, mm_dtype, vmem_limit):
    n_p = adj_p.shape[0]
    fi_p, fo_p = w_p.shape
    mm_bytes = jnp.dtype(mm_dtype).itemsize

    # 1) XW = H @ W, tiled over node rows (lane-dense fo_p output).
    xw = pl.pallas_call(
        _xw_kernel,
        out_shape=jax.ShapeDtypeStruct((n_p, fo_p), mm_dtype),
        grid=(n_p // tm,),
        in_specs=[pl.BlockSpec((tm, fi_p), lambda i: (i, 0)),
                  pl.BlockSpec((fi_p, fo_p), lambda i: (0, 0))],
        out_specs=pl.BlockSpec((tm, fo_p), lambda i: (i, 0)),
        compiler_params=pltpu.CompilerParams(
            dimension_semantics=("parallel",),
            vmem_limit_bytes=vmem_limit),
    )(h_p, w_p)

    # 2) out = act(Â @ XW + b): adj streamed as (tm, tk) tiles, accumulate over k.
    out = pl.pallas_call(
        functools.partial(_agg_kernel, apply_relu=apply_relu),
        out_shape=jax.ShapeDtypeStruct((n_p, fo_p), jnp.float32),
        grid=(n_p // tm, n_p // tk),
        in_specs=[pl.BlockSpec((tm, tk), lambda i, k: (i, k)),
                  pl.BlockSpec((tk, fo_p), lambda i, k: (k, 0)),
                  pl.BlockSpec((1, fo_p), lambda i, k: (0, 0))],
        out_specs=pl.BlockSpec((tm, fo_p), lambda i, k: (i, 0)),
        scratch_shapes=[pltpu.VMEM((tm, fo_p), jnp.float32)],
        compiler_params=pltpu.CompilerParams(
            dimension_semantics=("parallel", "arbitrary"),
            vmem_limit_bytes=vmem_limit),
        cost_estimate=pl.CostEstimate(
            flops=2 * n_p * n_p * fo_p, transcendentals=0,
            bytes_accessed=int(n_p * n_p * mm_bytes
                               + n_p * fo_p * (mm_bytes + 4))),
    )(adj_p, xw, b_p)
    return out


# ---------------------------------------------------------------------------
# Wrapper: GCN.forward
# ---------------------------------------------------------------------------
def gcn_forward(adj, features, params, *, matmul_dtype=jnp.bfloat16,
                force_tiled=False):
    """GCN.forward. Hidden layers use ReLU, final layer linear.

    Dropout between layers is identity in inference mode.
    matmul_dtype: MXU input dtype (bf16 default, f32 accumulation either way).
    """
    # TODO(synk): training-mode dropout not implemented (eval semantics used).
    n = features.shape[0]
    n_p = _round_up(max(n, 128), 128)          # lane-dense adj, full MXU K
    mm_bytes = jnp.dtype(matmul_dtype).itemsize

    layer_dims = tuple((int(w.shape[0]), int(w.shape[1])) for w, _ in params)
    padded_dims = tuple((_round_up(fi, 128), _round_up(fo, 128))
                        for fi, fo in layer_dims)
    n_layers = len(params)
    f_out_last = layer_dims[-1][1]
    f_out_last_p = padded_dims[-1][1]
    f_max_p = max(max(fi, fo) for fi, fo in padded_dims)

    # Zero-padded, lane-dense operands. adj & W go straight to the matmul dtype.
    adj_p = jnp.zeros((n_p, n_p), matmul_dtype).at[:n, :n].set(
        adj.astype(matmul_dtype))
    f_in0_p = padded_dims[0][0]
    feat_p = jnp.zeros((n_p, f_in0_p), jnp.float32).at[
        :n, :features.shape[1]].set(features)

    w_ps, b_ps = [], []
    for (w, b), (fi_p, fo_p) in zip(params, padded_dims):
        w_ps.append(jnp.zeros((fi_p, fo_p), matmul_dtype).at[
            :w.shape[0], :w.shape[1]].set(w.astype(matmul_dtype)))
        b_ps.append(jnp.zeros((1, fo_p), jnp.float32).at[
            :, :b.shape[-1]].set(b.reshape(1, -1)))

    # Bytes that must be VMEM-resident simultaneously in the fused path.
    resident = (adj_p.size * mm_bytes
                + feat_p.size * 4
                + sum(int(x.size) * mm_bytes for x in w_ps)
                + sum(int(x.size) * 4 for x in b_ps)
                + 3 * n_p * f_max_p * 4)       # h + f32 intermediate + cast copy
    fused_budget = 48 << 20                    # fits every chip (v7x has 64 MiB VMEM)
    use_fused = (not force_tiled) and resident <= fused_budget

    if use_fused:
        wb_inputs = []
        for w_p, b_p in zip(w_ps, b_ps):
            wb_inputs += [w_p, b_p]

        kernel = functools.partial(_gcn_fused_kernel,
                                   padded_dims=padded_dims, n_layers=n_layers)

        flops = 0
        for (fi_p, fo_p) in padded_dims:
            flops += 2 * n_p * n_p * min(fi_p, fo_p) + 2 * n_p * fi_p * fo_p
        bytes_accessed = (adj_p.size * mm_bytes + feat_p.size * 4
                          + sum(int(x.size) * x.dtype.itemsize for x in wb_inputs)
                          + n_p * f_out_last_p * 4)
        vmem_limit = int(min(max(2 * resident + (8 << 20), 32 << 20), 100 << 20))

        n_inputs = 2 + len(wb_inputs)
        out_p = pl.pallas_call(
            kernel,
            out_shape=jax.ShapeDtypeStruct((n_p, f_out_last_p), jnp.float32),
            in_specs=[pl.BlockSpec(memory_space=pltpu.MemorySpace.VMEM)
                      for _ in range(n_inputs)],
            out_specs=pl.BlockSpec(memory_space=pltpu.MemorySpace.VMEM),
            compiler_params=pltpu.CompilerParams(vmem_limit_bytes=vmem_limit),
            cost_estimate=pl.CostEstimate(flops=int(flops), transcendentals=0,
                                          bytes_accessed=int(bytes_accessed)),
        )(adj_p, feat_p, *wb_inputs)
    else:
        # Streamed/tiled path: adj streamed per layer; H round-trips HBM between
        # layers (unavoidable once adj no longer fits VMEM, e.g. large N on v7x).
        tm = min(256, n_p)
        tk = min(512, n_p)
        while n_p % tm:
            tm -= 128
        while n_p % tk:
            tk -= 128
        tile_resident = (2 * tm * tk * mm_bytes        # double-buffered adj tiles
                         + 2 * tk * f_max_p * mm_bytes  # double-buffered XW tiles
                         + 2 * tm * f_max_p * 4         # double-buffered out tiles
                         + tm * f_max_p * 4)            # f32 accumulator
        vmem_limit = int(min(max(2 * tile_resident + (8 << 20), 32 << 20), 100 << 20))

        h_p = feat_p
        for l in range(n_layers):
            h_p = _tiled_layer(adj_p, h_p, w_ps[l], b_ps[l],
                               apply_relu=(l != n_layers - 1),
                               tm=tm, tk=tk, mm_dtype=matmul_dtype,
                               vmem_limit=vmem_limit)
        out_p = h_p

    # Slice padded rows/cols back off.
    return out_p[:n, :f_out_last]


# ---------------------------------------------------------------------------
# Deterministic example construction + checks
# ---------------------------------------------------------------------------
def _xavier_uniform(key, shape):
    fan_in, fan_out = shape
    limit = (6.0 / (fan_in + fan_out)) ** 0.5
    return jax.random.uniform(key, shape, jnp.float32, -limit, limit)


def build_params(key, in_feats, n_hidden, n_classes, n_layers):
    """Matches GCN.__init__: 1 input layer + (n_layers-1) hidden + 1 output."""
    dims = [in_feats] + [n_hidden] * n_layers + [n_classes]
    params = []
    for i in range(len(dims) - 1):
        key, wk = jax.random.split(key)
        w = _xavier_uniform(wk, (dims[i], dims[i + 1]))
        b = jnp.zeros((1, dims[i + 1]), jnp.float32)
        params.append((w, b))
    return params


def build_normalized_adj(key, n_nodes):
    """Random undirected graph + self loops, Â = D^{-1/2} A D^{-1/2}."""
    a = (jax.random.uniform(key, (n_nodes, n_nodes)) < 0.3).astype(jnp.float32)
    a = jnp.maximum(a, a.T)                      # undirected
    a = jnp.maximum(a, jnp.eye(n_nodes))         # self loops (avoids zero-degree)
    deg = a.sum(axis=1)
    d_inv_sqrt = 1.0 / jnp.sqrt(deg)
    return a * d_inv_sqrt[:, None] * d_inv_sqrt[None, :]


if __name__ == "__main__":
    key = jax.random.PRNGKey(0)
    k_adj, k_feat, k_param = jax.random.split(key, 3)

    # Small shapes consistent with the module
    n_nodes = 8
    in_feats = 16
    n_hidden = 32
    n_classes = 4
    n_layers = 2   # -> 3 GraphConv layers total (input + 1 hidden + output)

    adj = build_normalized_adj(k_adj, n_nodes)                              # [N, N]
    features = jax.random.normal(k_feat, (n_nodes, in_feats), jnp.float32)  # [N, F_in]
    params = build_params(k_param, in_feats, n_hidden, n_classes, n_layers)

    # Plain-JAX f32 reference of the same math (eval-mode dropout = identity).
    h_ref = features
    for i, (w, b) in enumerate(params):
        h_ref = adj @ (h_ref @ w) + b
        if i != len(params) - 1:
            h_ref = jnp.maximum(h_ref, 0.0)

    # 1) Default fast path: fused, fully VMEM-resident, bf16 MXU inputs, f32 accum.
    out_bf16 = gcn_forward(adj, features, params)
    jax.block_until_ready(out_bf16)
    assert out_bf16.shape == (n_nodes, n_classes)
    assert jnp.allclose(out_bf16, h_ref, atol=1e-1, rtol=1e-1), float(
        jnp.max(jnp.abs(out_bf16 - h_ref)))

    # 2) f32 opt-in mode: bit-tight check of the padding / fusion math.
    out_f32 = gcn_forward(adj, features, params, matmul_dtype=jnp.float32)
    jax.block_until_ready(out_f32)
    assert jnp.allclose(out_f32, h_ref, atol=1e-4, rtol=1e-4), float(
        jnp.max(jnp.abs(out_f32 - h_ref)))

    # 3) Streamed/tiled fallback (auto-selected for large graphs; forced here).
    out_tiled = gcn_forward(adj, features, params, matmul_dtype=jnp.float32,
                            force_tiled=True)
    jax.block_until_ready(out_tiled)
    assert jnp.allclose(out_tiled, h_ref, atol=1e-4, rtol=1e-4), float(
        jnp.max(jnp.abs(out_tiled - h_ref)))

    print("KERNEL_OK")
</pallas_src>

<mosaic_0001>
module attributes {stable_mosaic.version = 11 : i64} {
  func.func @_gcn_fused_kernel(%arg0: memref<128x128xbf16, #tpu.memory_space<vmem>>, %arg1: memref<128x128xf32, #tpu.memory_space<vmem>>, %arg2: memref<128x128xbf16, #tpu.memory_space<vmem>>, %arg3: memref<1x128xf32, #tpu.memory_space<vmem>>, %arg4: memref<128x128xbf16, #tpu.memory_space<vmem>>, %arg5: memref<1x128xf32, #tpu.memory_space<vmem>>, %arg6: memref<128x128xbf16, #tpu.memory_space<vmem>>, %arg7: memref<1x128xf32, #tpu.memory_space<vmem>>, %arg8: memref<128x128xf32, #tpu.memory_space<vmem>>) attributes {dimension_semantics = [], scalar_prefetch = 0 : i64, scratch_operands = 0 : i64, tpu.core_type = #tpu.core_type<tc>} {
    %c0 = arith.constant 0 : index
    %c0_0 = arith.constant 0 : index
    %0 = vector.load %arg0[%c0, %c0_0] : memref<128x128xbf16, #tpu.memory_space<vmem>>, vector<128x128xbf16>
    %c0_1 = arith.constant 0 : index
    %c0_2 = arith.constant 0 : index
    %1 = vector.load %arg1[%c0_1, %c0_2] : memref<128x128xf32, #tpu.memory_space<vmem>>, vector<128x128xf32>
    %c0_3 = arith.constant 0 : index
    %c0_4 = arith.constant 0 : index
    %2 = vector.load %arg2[%c0_3, %c0_4] : memref<128x128xbf16, #tpu.memory_space<vmem>>, vector<128x128xbf16>
    %c0_5 = arith.constant 0 : index
    %c0_6 = arith.constant 0 : index
    %3 = vector.load %arg3[%c0_5, %c0_6] : memref<1x128xf32, #tpu.memory_space<vmem>>, vector<1x128xf32>
    %4 = arith.truncf %1 : vector<128x128xf32> to vector<128x128xbf16>
    %cst = arith.constant dense<0.000000e+00> : vector<128x128xf32>
    %5 = tpu.matmul %0, %4, %cst {dimension_numbers = #tpu.dot_dimension_numbers<[1], [0], [0], [1], [0, 0, 1, 1], [], []>} : vector<128x128xbf16>, vector<128x128xbf16>, vector<128x128xf32> -> vector<128x128xf32>
    %6 = arith.truncf %5 : vector<128x128xf32> to vector<128x128xbf16>
    %cst_7 = arith.constant dense<0.000000e+00> : vector<128x128xf32>
    %7 = tpu.matmul %6, %2, %cst_7 {dimension_numbers = #tpu.dot_dimension_numbers<[1], [0], [0], [1], [0, 0, 1, 1], [], []>} : vector<128x128xbf16>, vector<128x128xbf16>, vector<128x128xf32> -> vector<128x128xf32>
    %8 = vector.broadcast %3 : vector<1x128xf32> to vector<128x128xf32>
    %9 = arith.addf %7, %8 : vector<128x128xf32>
    %cst_8 = arith.constant 0.000000e+00 : f32
    %10 = vector.broadcast %cst_8 : f32 to vector<128x128xf32>
    %11 = arith.maximumf %9, %10 : vector<128x128xf32>
    %c0_9 = arith.constant 0 : index
    %c0_10 = arith.constant 0 : index
    %12 = vector.load %arg4[%c0_9, %c0_10] : memref<128x128xbf16, #tpu.memory_space<vmem>>, vector<128x128xbf16>
    %c0_11 = arith.constant 0 : index
    %c0_12 = arith.constant 0 : index
    %13 = vector.load %arg5[%c0_11, %c0_12] : memref<1x128xf32, #tpu.memory_space<vmem>>, vector<1x128xf32>
    %14 = arith.truncf %11 : vector<128x128xf32> to vector<128x128xbf16>
    %cst_13 = arith.constant dense<0.000000e+00> : vector<128x128xf32>
    %15 = tpu.matmul %0, %14, %cst_13 {dimension_numbers = #tpu.dot_dimension_numbers<[1], [0], [0], [1], [0, 0, 1, 1], [], []>} : vector<128x128xbf16>, vector<128x128xbf16>, vector<128x128xf32> -> vector<128x128xf32>
    %16 = arith.truncf %15 : vector<128x128xf32> to vector<128x128xbf16>
    %cst_14 = arith.constant dense<0.000000e+00> : vector<128x128xf32>
    %17 = tpu.matmul %16, %12, %cst_14 {dimension_numbers = #tpu.dot_dimension_numbers<[1], [0], [0], [1], [0, 0, 1, 1], [], []>} : vector<128x128xbf16>, vector<128x128xbf16>, vector<128x128xf32> -> vector<128x128xf32>
    %18 = vector.broadcast %13 : vector<1x128xf32> to vector<128x128xf32>
    %19 = arith.addf %17, %18 : vector<128x128xf32>
    %cst_15 = arith.constant 0.000000e+00 : f32
    %20 = vector.broadcast %cst_15 : f32 to vector<128x128xf32>
    %21 = arith.maximumf %19, %20 : vector<128x128xf32>
    %c0_16 = arith.constant 0 : index
    %c0_17 = arith.constant 0 : index
    %22 = vector.load %arg6[%c0_16, %c0_17] : memref<128x128xbf16, #tpu.memory_space<vmem>>, vector<128x128xbf16>
    %c0_18 = arith.constant 0 : index
    %c0_19 = arith.constant 0 : index
    %23 = vector.load %arg7[%c0_18, %c0_19] : memref<1x128xf32, #tpu.memory_space<vmem>>, vector<1x128xf32>
    %24 = arith.truncf %21 : vector<128x128xf32> to vector<128x128xbf16>
    %cst_20 = arith.constant dense<0.000000e+00> : vector<128x128xf32>
    %25 = tpu.matmul %0, %24, %cst_20 {dimension_numbers = #tpu.dot_dimension_numbers<[1], [0], [0], [1], [0, 0, 1, 1], [], []>} : vector<128x128xbf16>, vector<128x128xbf16>, vector<128x128xf32> -> vector<128x128xf32>
    %26 = arith.truncf %25 : vector<128x128xf32> to vector<128x128xbf16>
    %cst_21 = arith.constant dense<0.000000e+00> : vector<128x128xf32>
    %27 = tpu.matmul %26, %22, %cst_21 {dimension_numbers = #tpu.dot_dimension_numbers<[1], [0], [0], [1], [0, 0, 1, 1], [], []>} : vector<128x128xbf16>, vector<128x128xbf16>, vector<128x128xf32> -> vector<128x128xf32>
    %28 = vector.broadcast %23 : vector<1x128xf32> to vector<128x128xf32>
    %29 = arith.addf %27, %28 : vector<128x128xf32>
    %c0_22 = arith.constant 0 : index
    %c0_23 = arith.constant 0 : index
    %30 = vector.load %arg8[%c0_22, %c0_23] : memref<128x128xf32, #tpu.memory_space<vmem>>, vector<128x128xf32>
    tpu.vector_store %arg8[%c0_22, %c0_23], %29 {strides = array<i32>} : memref<128x128xf32, #tpu.memory_space<vmem>>, vector<128x128xf32>,
    return
  }
}

</mosaic_0001>

<llo_original>
// kernel: tpu_custom_call.1
$region0: #{tpu_custom_call.1}
  #allocation0 [shape = 'u32[]', space=smem, size = 0x4, offset = 0x4, fixed_abs, tag = 'smem constant byte address 0x4 - core index']
  #allocation1 [shape = 'u32[144,128]{1,0:T(1,128)}', space=vmem, size = 0x12000, scoped, tag = 'internal scratch']
  %s0 = inlined_call_operand.hbm [shape: bf16[128,128], index: 0, kind: input, shape index: {}]
  %s1 = inlined_call_operand.hbm [shape: f32[128,128], index: 1, kind: input, shape index: {}]
  %s2 = inlined_call_operand.hbm [shape: bf16[128,128], index: 2, kind: input, shape index: {}]
  %s3 = inlined_call_operand.vmem [shape: f32[1,128], index: 3, kind: input, shape index: {}]
  %s4 = inlined_call_operand.hbm [shape: bf16[128,128], index: 4, kind: input, shape index: {}]
  %s5 = inlined_call_operand.vmem [shape: f32[1,128], index: 5, kind: input, shape index: {}]
  %s6 = inlined_call_operand.hbm [shape: bf16[128,128], index: 6, kind: input, shape index: {}]
  %s7 = inlined_call_operand.vmem [shape: f32[1,128], index: 7, kind: input, shape index: {}]
  %s8 = inlined_call_operand.hbm [shape: f32[128,128], index: 8, kind: output, shape index: {}]
  %s9 = sld [smem:[#allocation0]]
  $region62: #{tpu_custom_call.1} parent=0
    _
  %s11 = ssub.s32 1, %s9
  %s12 = scalar_select 0, %s11, %s9
  $region1: #{tpu_custom_call.1} parent=0
    #allocation2 [shape = 'u8[32768]{0}', space=vmem, size = 0x8000, scoped, tag = 'input window, operand 0, single buffered']
    #allocation3 [shape = 's32[1]{0}', space=sflag, size = 0x4, scoped, tag = 'scoped memory for tpu_custom_call.1']
    #allocation4 [shape = 's32[1]{0}', space=sflag, size = 0x4, scoped, tag = 'scoped memory for tpu_custom_call.1']
    #allocation5 [shape = 'u8[65536]{0}', space=vmem, size = 0x10000, scoped, tag = 'input window, operand 1, single buffered']
    #allocation6 [shape = 's32[1]{0}', space=sflag, size = 0x4, scoped, tag = 'scoped memory for tpu_custom_call.1']
    #allocation7 [shape = 'u8[32768]{0}', space=vmem, size = 0x8000, scoped, tag = 'input window, operand 2, single buffered']
    #allocation8 [shape = 'u8[32768]{0}', space=vmem, size = 0x8000, scoped, tag = 'input window, operand 4, single buffered']
    #allocation9 [shape = 's32[1]{0}', space=sflag, size = 0x4, scoped, tag = 'scoped memory for tpu_custom_call.1']
    #allocation10 [shape = 'u8[32768]{0}', space=vmem, size = 0x8000, scoped, tag = 'input window, operand 6, single buffered']
    #allocation11 [shape = 'u8[65536]{0}', space=vmem, size = 0x10000, scoped, tag = 'output window, operand 0, single buffered']
    %13 = vsyncpa [#allocation3], 0
    %14 = vsyncpa [#allocation6], 0
    %15 = vsyncpa [#allocation9], 0
    %16 = vsyncpa [#allocation4], 0
    // Predicated region
    $region2: #{tpu_custom_call.1} parent=1 // pred_check
      _
    $region3: #{tpu_custom_call.1} parent=1 // pred_check_branch
      %18 = sbr.rel (0) target = $region5
    $region4: #{tpu_custom_call.1} parent=1 // pred_region
      %s20 = ssub.s32 1024, 1024
      %21 = vsyncadd [#allocation3], %s20
      %s22 = sshll.u32 [#allocation2], 4
      %s23 = int_to_ptr.vmem [resolvable:$true] %s22
      %28 = dma.hbm_to_vmem [thread:$0]  %s0, 1024, %s23, [#allocation3], 64, 64, 4
    $region5: #{tpu_custom_call.1} parent=1 // pred_fallthru
      _
    // Predicated region
    $region6: #{tpu_custom_call.1} parent=1 // pred_check
      _
    $region7: #{tpu_custom_call.1} parent=1 // pred_check_branch
      %30 = sbr.rel (0) target = $region9
    $region8: #{tpu_custom_call.1} parent=1 // pred_region
      %s32 = ssub.s32 2048, 2048
      %33 = vsyncadd [#allocation6], %s32
      %s34 = sshll.u32 [#allocation5], 4
      %s35 = int_to_ptr.vmem [resolvable:$true] %s34
      %40 = dma.hbm_to_vmem [thread:$0]  %s1, 2048, %s35, [#allocation6], 128, 128, 8
    $region9: #{tpu_custom_call.1} parent=1 // pred_fallthru
      _
    // Predicated region
    $region10: #{tpu_custom_call.1} parent=1 // pred_check
      _
    $region11: #{tpu_custom_call.1} parent=1 // pred_check_branch
      %42 = sbr.rel (0) target = $region13
    $region12: #{tpu_custom_call.1} parent=1 // pred_region
      %s44 = ssub.s32 1024, 1024
      %45 = vsyncadd [#allocation6], %s44
      %s46 = sshll.u32 [#allocation7], 4
      %s47 = int_to_ptr.vmem [resolvable:$true] %s46
      %52 = dma.hbm_to_vmem [thread:$0]  %s2, 1024, %s47, [#allocation6], 64, 64, 4
    $region13: #{tpu_custom_call.1} parent=1 // pred_fallthru
      _
    // Predicated region
    $region14: #{tpu_custom_call.1} parent=1 // pred_check
      _
    $region15: #{tpu_custom_call.1} parent=1 // pred_check_branch
      %54 = sbr.rel (0) target = $region17
    $region16: #{tpu_custom_call.1} parent=1 // pred_region
      _
    $region17: #{tpu_custom_call.1} parent=1 // pred_fallthru
      _
    // Predicated region
    $region18: #{tpu_custom_call.1} parent=1 // pred_check
      _
    $region19: #{tpu_custom_call.1} parent=1 // pred_check_branch
      %56 = sbr.rel (0) target = $region21
    $region20: #{tpu_custom_call.1} parent=1 // pred_region
      %s58 = ssub.s32 1024, 1024
      %59 = vsyncadd [#allocation9], %s58
      %s60 = sshll.u32 [#allocation8], 4
      %s61 = int_to_ptr.vmem [resolvable:$true] %s60
      %66 = dma.hbm_to_vmem [thread:$0]  %s4, 1024, %s61, [#allocation9], 64, 64, 4
    $region21: #{tpu_custom_call.1} parent=1 // pred_fallthru
      _
    // Predicated region
    $region22: #{tpu_custom_call.1} parent=1 // pred_check
      _
    $region23: #{tpu_custom_call.1} parent=1 // pred_check_branch
      %68 = sbr.rel (0) target = $region25
    $region24: #{tpu_custom_call.1} parent=1 // pred_region
      _
    $region25: #{tpu_custom_call.1} parent=1 // pred_fallthru
      _
    // Predicated region
    $region26: #{tpu_custom_call.1} parent=1 // pred_check
      _
    $region27: #{tpu_custom_call.1} parent=1 // pred_check_branch
      %70 = sbr.rel (0) target = $region29
    $region28: #{tpu_custom_call.1} parent=1 // pred_region
      %s72 = ssub.s32 1024, 1024
      %73 = vsyncadd [#allocation9], %s72
      %s74 = sshll.u32 [#allocation10], 4
      %s75 = int_to_ptr.vmem [resolvable:$true] %s74
      %80 = dma.hbm_to_vmem [thread:$0]  %s6, 1024, %s75, [#allocation9], 64, 64, 4
    $region29: #{tpu_custom_call.1} parent=1 // pred_fallthru
      _
    // Predicated region
    $region30: #{tpu_custom_call.1} parent=1 // pred_check
      _
    $region31: #{tpu_custom_call.1} parent=1 // pred_check_branch
      %82 = sbr.rel (0) target = $region33
    $region32: #{tpu_custom_call.1} parent=1 // pred_region
      _
    $region33: #{tpu_custom_call.1} parent=1 // pred_fallthru
      _
    // Predicated region
    $region34: #{tpu_custom_call.1} parent=1 // pred_check
      _
    $region35: #{tpu_custom_call.1} parent=1 // pred_check_branch
      %84 = sbr.rel (0) target = $region37
    $region36: #{tpu_custom_call.1} parent=1 // pred_region
      %85 = dma.done [#allocation3], 1024
    $region37: #{tpu_custom_call.1} parent=1 // pred_fallthru
      _
    // Predicated region
    $region38: #{tpu_custom_call.1} parent=1 // pred_check
      _
    $region39: #{tpu_custom_call.1} parent=1 // pred_check_branch
      %87 = sbr.rel (0) target = $region41
    $region40: #{tpu_custom_call.1} parent=1 // pred_region
      %88 = dma.done [#allocation6], 2048
    $region41: #{tpu_custom_call.1} parent=1 // pred_fallthru
      _
    // Predicated region
    $region42: #{tpu_custom_call.1} parent=1 // pred_check
      _
    $region43: #{tpu_custom_call.1} parent=1 // pred_check_branch
      %90 = sbr.rel (0) target = $region45
    $region44: #{tpu_custom_call.1} parent=1 // pred_region
      %91 = dma.done [#allocation6], 1024
    $region45: #{tpu_custom_call.1} parent=1 // pred_fallthru
      _
    // Predicated region
    $region46: #{tpu_custom_call.1} parent=1 // pred_check
      _
    $region47: #{tpu_custom_call.1} parent=1 // pred_check_branch
      %93 = sbr.rel (0) target = $region49
    $region48: #{tpu_custom_call.1} parent=1 // pred_region
      %94 = dma.done [#allocation9], 1024
    $region49: #{tpu_custom_call.1} parent=1 // pred_fallthru
      _
    // Predicated region
    $region50: #{tpu_custom_call.1} parent=1 // pred_check
      _
    $region51: #{tpu_custom_call.1} parent=1 // pred_check_branch
      %96 = sbr.rel (0) target = $region53
    $region52: #{tpu_custom_call.1} parent=1 // pred_region
      %97 = dma.done [#allocation9], 1024
    $region53: #{tpu_custom_call.1} parent=1 // pred_fallthru
      _
    %v99 = vld [vmem:[#allocation2] sm:$0xf]
    %v100 = vld [vmem:[#allocation2 + $0x4] sm:$0xf]
    %v101 = vld [vmem:[#allocation2 + $0x8] sm:$0xf]
    %v102 = vld [vmem:[#allocation2 + $0xc] sm:$0xf]
    %v103 = vld [vmem:[#allocation2 + $0x10] sm:$0xf]
    %v104 = vld [vmem:[#allocation2 + $0x14] sm:$0xf]
    %v105 = vld [vmem:[#allocation2 + $0x18] sm:$0xf]
    %v106 = vld [vmem:[#allocation2 + $0x1c] sm:$0xf]
    %v107 = vld [vmem:[#allocation2 + $0x20] sm:$0xf]
    %v108 = vld [vmem:[#allocation2 + $0x24] sm:$0xf]
    %v109 = vld [vmem:[#allocation2 + $0x28] sm:$0xf]
    %v110 = vld [vmem:[#allocation2 + $0x2c] sm:$0xf]
    %v111 = vld [vmem:[#allocation2 + $0x30] sm:$0xf]
    %v112 = vld [vmem:[#allocation2 + $0x34] sm:$0xf]
    %v113 = vld [vmem:[#allocation2 + $0x38] sm:$0xf]
    %v114 = vld [vmem:[#allocation2 + $0x3c] sm:$0xf]
    %v115 = vld [vmem:[#allocation5] sm:$0xff]
    %v116 = vld [vmem:[#allocation5 + $0x8] sm:$0xff]
    %v117 = vld [vmem:[#allocation5 + $0x10] sm:$0xff]
    %v118 = vld [vmem:[#allocation5 + $0x18] sm:$0xff]
    %v119 = vld [vmem:[#allocation5 + $0x20] sm:$0xff]
    %v120 = vld [vmem:[#allocation5 + $0x28] sm:$0xff]
    %v121 = vld [vmem:[#allocation5 + $0x30] sm:$0xff]
    %v122 = vld [vmem:[#allocation5 + $0x38] sm:$0xff]
    %v123 = vld [vmem:[#allocation5 + $0x40] sm:$0xff]
    %v124 = vld [vmem:[#allocation5 + $0x48] sm:$0xff]
    %v125 = vld [vmem:[#allocation5 + $0x50] sm:$0xff]
    %v126 = vld [vmem:[#allocation5 + $0x58] sm:$0xff]
    %v127 = vld [vmem:[#allocation5 + $0x60] sm:$0xff]
    %v128 = vld [vmem:[#allocation5 + $0x68] sm:$0xff]
    %v129 = vld [vmem:[#allocation5 + $0x70] sm:$0xff]
    %v130 = vld [vmem:[#allocation5 + $0x78] sm:$0xff]
    %v131 = vld [vmem:[#allocation7] sm:$0xf]
    %v132 = vld [vmem:[#allocation7 + $0x4] sm:$0xf]
    %v133 = vld [vmem:[#allocation7 + $0x8] sm:$0xf]
    %v134 = vld [vmem:[#allocation7 + $0xc] sm:$0xf]
    %v135 = vld [vmem:[#allocation7 + $0x10] sm:$0xf]
    %v136 = vld [vmem:[#allocation7 + $0x14] sm:$0xf]
    %v137 = vld [vmem:[#allocation7 + $0x18] sm:$0xf]
    %v138 = vld [vmem:[#allocation7 + $0x1c] sm:$0xf]
    %v139 = vld [vmem:[#allocation7 + $0x20] sm:$0xf]
    %v140 = vld [vmem:[#allocation7 + $0x24] sm:$0xf]
    %v141 = vld [vmem:[#allocation7 + $0x28] sm:$0xf]
    %v142 = vld [vmem:[#allocation7 + $0x2c] sm:$0xf]
    %v143 = vld [vmem:[#allocation7 + $0x30] sm:$0xf]
    %v144 = vld [vmem:[#allocation7 + $0x34] sm:$0xf]
    %v145 = vld [vmem:[#allocation7 + $0x38] sm:$0xf]
    %v146 = vld [vmem:[#allocation7 + $0x3c] sm:$0xf]
    %v147 = vld [vmem:[%s3] sm:$0x1]
    %v148 = vpack.c.bf16 %v116, %v115
    %v149 = vpack.c.bf16 %v118, %v117
    %v150 = vpack.c.bf16 %v120, %v119
    %v151 = vpack.c.bf16 %v122, %v121
    %v152 = vpack.c.bf16 %v124, %v123
    %v153 = vpack.c.bf16 %v126, %v125
    %v154 = vpack.c.bf16 %v128, %v127
    %v155 = vpack.c.bf16 %v130, %v129
    %v172 = vunpack.c.l.b16 %v99
    %v173 = vunpack.c.l.b16 %v100
    %v174 = vunpack.c.l.b16 %v101
    %v175 = vunpack.c.l.b16 %v102
    %v176 = vunpack.c.l.b16 %v103
    %v177 = vunpack.c.l.b16 %v104
    %v178 = vunpack.c.l.b16 %v105
    %v179 = vunpack.c.l.b16 %v106
    %v180 = vunpack.c.l.b16 %v107
    %v181 = vunpack.c.l.b16 %v108
    %v182 = vunpack.c.l.b16 %v109
    %v183 = vunpack.c.l.b16 %v110
    %v184 = vunpack.c.l.b16 %v111
    %v185 = vunpack.c.l.b16 %v112
    %v186 = vunpack.c.l.b16 %v113
    %v187 = vunpack.c.l.b16 %v114
    %v188 = vpack.c.b16 %v173, %v172
    %v189 = vpack.c.b16 %v175, %v174
    %v190 = vpack.c.b16 %v177, %v176
    %v191 = vpack.c.b16 %v179, %v178
    %v192 = vpack.c.b16 %v181, %v180
    %v193 = vpack.c.b16 %v183, %v182
    %v194 = vpack.c.b16 %v185, %v184
    %v195 = vpack.c.b16 %v187, %v186
    %204 = vmatprep.subr.bf16.mxu0 0
    %205 = vmatpush1.bf16.msra.mxu0 %v148
    %206 = vmatprep.subr.bf16.mxu0 0
    %207 = vmatpush1.bf16.msra.mxu0 %v149
    %208 = vmatprep.subr.bf16.mxu0 0
    %209 = vmatpush1.bf16.msra.mxu0 %v150
    %210 = vmatprep.subr.bf16.mxu0 0
    %211 = vmatpush1.bf16.msra.mxu0 %v151
    %212 = vmatprep.subr.bf16.mxu0 0
    %213 = vmatpush1.bf16.msra.mxu0 %v152
    %214 = vmatprep.subr.bf16.mxu0 0
    %215 = vmatpush1.bf16.msra.mxu0 %v153
    %216 = vmatprep.subr.bf16.mxu0 0
    %217 = vmatpush1.bf16.msra.mxu0 %v154
    %218 = vmatprep.subr.bf16.mxu0 0
    %219 = vmatpush1.bf16.msra.mxu0 %v155
    %220 = vmatprep.subr.bf16.mxu0 0
    %221 = vmatpush1.bf16.msra.mxu0 0
    %222 = vmatprep.subr.bf16.mxu0 0
    %223 = vmatpush1.bf16.msra.mxu0 0
    %224 = vmatprep.subr.bf16.mxu0 0
    %225 = vmatpush1.bf16.msra.mxu0 0
    %226 = vmatprep.subr.bf16.mxu0 0
    %227 = vmatpush1.bf16.msra.mxu0 0
    %228 = vmatprep.subr.bf16.mxu0 0
    %229 = vmatpush1.bf16.msra.mxu0 0
    %230 = vmatprep.subr.bf16.mxu0 0
    %231 = vmatpush1.bf16.msra.mxu0 0
    %232 = vmatprep.subr.bf16.mxu0 0
    %233 = vmatpush1.bf16.msra.mxu0 0
    %234 = vmatprep.subr.bf16.mxu0 0
    %235 = vmatpush1.bf16.msra.mxu0 0
    %236 = vmatprep.mubr.bf16.mxu0 0
    %237 = vmatmul.mubr.bf16.gmra.mrb[0].mxu0 %v188
    %v238 = vpop.f32.mrb[0].mxu0
    %v239 = vadd.f32 0.0, %v238
    %v240 = vpop.f32.mrb[0].mxu0
    %v241 = vpop.f32.mrb[0].mxu0
    %v242 = vadd.f32 0.0, %v241
    %v243 = vpop.f32.mrb[0].mxu0
    %244 = vmatprep.mubr.bf16.mxu0 0
    %245 = vmatmul.mubr.bf16.gmra.mrb[0].mxu0 %v189
    %v246 = vpop.f32.mrb[0].mxu0
    %v247 = vadd.f32 0.0, %v246
    %v248 = vpop.f32.mrb[0].mxu0
    %v249 = vpop.f32.mrb[0].mxu0
    %v250 = vadd.f32 0.0, %v249
    %v251 = vpop.f32.mrb[0].mxu0
    %252 = vmatprep.mubr.bf16.mxu0 0
    %253 = vmatmul.mubr.bf16.gmra.mrb[0].mxu0 %v190
    %v254 = vpop.f32.mrb[0].mxu0
    %v255 = vadd.f32 0.0, %v254
    %v256 = vpop.f32.mrb[0].mxu0
    %v257 = vpop.f32.mrb[0].mxu0
    %v258 = vadd.f32 0.0, %v257
    %v259 = vpop.f32.mrb[0].mxu0
    %260 = vmatprep.mubr.bf16.mxu0 0
    %261 = vmatmul.mubr.bf16.gmra.mrb[0].mxu0 %v191
    %v262 = vpop.f32.mrb[0].mxu0
    %v263 = vadd.f32 0.0, %v262
    %v264 = vpop.f32.mrb[0].mxu0
    %v265 = vpop.f32.mrb[0].mxu0
    %v266 = vadd.f32 0.0, %v265
    %v267 = vpop.f32.mrb[0].mxu0
    %268 = vmatprep.mubr.bf16.mxu0 0
    %269 = vmatmul.mubr.bf16.gmra.mrb[0].mxu0 %v192
    %v270 = vpop.f32.mrb[0].mxu0
    %v271 = vadd.f32 0.0, %v270
    %v272 = vpop.f32.mrb[0].mxu0
    %v273 = vpop.f32.mrb[0].mxu0
    %v274 = vadd.f32 0.0, %v273
    %v275 = vpop.f32.mrb[0].mxu0
    %276 = vmatprep.mubr.bf16.mxu0 0
    %277 = vmatmul.mubr.bf16.gmra.mrb[0].mxu0 %v193
    %v278 = vpop.f32.mrb[0].mxu0
    %v279 = vadd.f32 0.0, %v278
    %v280 = vpop.f32.mrb[0].mxu0
    %v281 = vpop.f32.mrb[0].mxu0
    %v282 = vadd.f32 0.0, %v281
    %v283 = vpop.f32.mrb[0].mxu0
    %284 = vmatprep.mubr.bf16.mxu0 0
    %285 = vmatmul.mubr.bf16.gmra.mrb[0].mxu0 %v194
    %v286 = vpop.f32.mrb[0].mxu0
    %v287 = vadd.f32 0.0, %v286
    %v288 = vpop.f32.mrb[0].mxu0
    %v289 = vpop.f32.mrb[0].mxu0
    %v290 = vadd.f32 0.0, %v289
    %v291 = vpop.f32.mrb[0].mxu0
    %292 = vmatprep.mubr.bf16.mxu0 0
    %293 = vmatmul.mubr.bf16.gmra.mrb[0].mxu0 %v195
    %v294 = vpop.f32.mrb[0].mxu0
    %v295 = vadd.f32 0.0, %v294
    %v296 = vpop.f32.mrb[0].mxu0
    %v297 = vpop.f32.mrb[0].mxu0
    %v298 = vadd.f32 0.0, %v297
    %v299 = vpop.f32.mrb[0].mxu0
    %300 = vdwg.mxu0
    %v301 = vpack.c.bf16 %v242, %v239
    %v302 = vpack.c.bf16 %v250, %v247
    %v303 = vpack.c.bf16 %v258, %v255
    %v304 = vpack.c.bf16 %v266, %v263
    %v305 = vpack.c.bf16 %v274, %v271
    %v306 = vpack.c.bf16 %v282, %v279
    %v307 = vpack.c.bf16 %v290, %v287
    %v308 = vpack.c.bf16 %v298, %v295
    %v310 = vlaneseq
    %v311 = vshrl.u32 %v310, 7
    %v312 = vsub.s32 0, %v311
    %v313 = vrot.slane %v147, %v312
    %v331 = vunpack.c.l.b16 %v131
    %v332 = vunpack.c.l.b16 %v132
    %v333 = vunpack.c.l.b16 %v133
    %v334 = vunpack.c.l.b16 %v134
    %v335 = vunpack.c.l.b16 %v135
    %v336 = vunpack.c.l.b16 %v136
    %v337 = vunpack.c.l.b16 %v137
    %v338 = vunpack.c.l.b16 %v138
    %v339 = vunpack.c.l.b16 %v139
    %v340 = vunpack.c.l.b16 %v140
    %v341 = vunpack.c.l.b16 %v141
    %v342 = vunpack.c.l.b16 %v142
    %v343 = vunpack.c.l.b16 %v143
    %v344 = vunpack.c.l.b16 %v144
    %v345 = vunpack.c.l.b16 %v145
    %v346 = vunpack.c.l.b16 %v146
    %v347 = vpack.c.b16 %v332, %v331
    %v348 = vpack.c.b16 %v334, %v333
    %v349 = vpack.c.b16 %v336, %v335
    %v350 = vpack.c.b16 %v338, %v337
    %v351 = vpack.c.b16 %v340, %v339
    %v352 = vpack.c.b16 %v342, %v341
    %v353 = vpack.c.b16 %v344, %v343
    %v354 = vpack.c.b16 %v346, %v345
    %363 = vmatprep.subr.bf16.mxu0 0
    %364 = vmatpush1.bf16.msra.mxu0 %v347
    %365 = vmatprep.subr.bf16.mxu0 0
    %366 = vmatpush1.bf16.msra.mxu0 %v348
    %367 = vmatprep.subr.bf16.mxu0 0
    %368 = vmatpush1.bf16.msra.mxu0 %v349
    %369 = vmatprep.subr.bf16.mxu0 0
    %370 = vmatpush1.bf16.msra.mxu0 %v350
    %371 = vmatprep.subr.bf16.mxu0 0
    %372 = vmatpush1.bf16.msra.mxu0 %v351
    %373 = vmatprep.subr.bf16.mxu0 0
    %374 = vmatpush1.bf16.msra.mxu0 %v352
    %375 = vmatprep.subr.bf16.mxu0 0
    %376 = vmatpush1.bf16.msra.mxu0 %v353
    %377 = vmatprep.subr.bf16.mxu0 0
    %378 = vmatpush1.bf16.msra.mxu0 %v354
    %379 = vmatprep.subr.bf16.mxu0 0
    %380 = vmatpush1.bf16.msra.mxu0 0
    %381 = vmatprep.subr.bf16.mxu0 0
    %382 = vmatpush1.bf16.msra.mxu0 0
    %383 = vmatprep.subr.bf16.mxu0 0
    %384 = vmatpush1.bf16.msra.mxu0 0
    %385 = vmatprep.subr.bf16.mxu0 0
    %386 = vmatpush1.bf16.msra.mxu0 0
    %387 = vmatprep.subr.bf16.mxu0 0
    %388 = vmatpush1.bf16.msra.mxu0 0
    %389 = vmatprep.subr.bf16.mxu0 0
    %390 = vmatpush1.bf16.msra.mxu0 0
    %391 = vmatprep.subr.bf16.mxu0 0
    %392 = vmatpush1.bf16.msra.mxu0 0
    %393 = vmatprep.subr.bf16.mxu0 0
    %394 = vmatpush1.bf16.msra.mxu0 0
    %395 = vmatprep.mubr.bf16.mxu0 0
    %396 = vmatmul.mubr.bf16.gmra.mrb[0].mxu0 %v301
    %v397 = vpop.f32.mrb[0].mxu0
    %v398 = vadd.f32 %v313, %v397
    %v399 = vpop.f32.mrb[0].mxu0
    %v400 = vpop.f32.mrb[0].mxu0
    %v401 = vadd.f32 %v313, %v400
    %v402 = vpop.f32.mrb[0].mxu0
    %403 = vmatprep.mubr.bf16.mxu0 0
    %404 = vmatmul.mubr.bf16.gmra.mrb[0].mxu0 %v302
    %v405 = vpop.f32.mrb[0].mxu0
    %v406 = vadd.f32 %v313, %v405
    %v407 = vpop.f32.mrb[0].mxu0
    %v408 = vpop.f32.mrb[0].mxu0
    %v409 = vadd.f32 %v313, %v408
    %v410 = vpop.f32.mrb[0].mxu0
    %411 = vmatprep.mubr.bf16.mxu0 0
    %412 = vmatmul.mubr.bf16.gmra.mrb[0].mxu0 %v303
    %v413 = vpop.f32.mrb[0].mxu0
    %v414 = vadd.f32 %v313, %v413
    %v415 = vpop.f32.mrb[0].mxu0
    %v416 = vpop.f32.mrb[0].mxu0
    %v417 = vadd.f32 %v313, %v416
    %v418 = vpop.f32.mrb[0].mxu0
    %419 = vmatprep.mubr.bf16.mxu0 0
    %420 = vmatmul.mubr.bf16.gmra.mrb[0].mxu0 %v304
    %v421 = vpop.f32.mrb[0].mxu0
    %v422 = vadd.f32 %v313, %v421
    %v423 = vpop.f32.mrb[0].mxu0
    %v424 = vpop.f32.mrb[0].mxu0
    %v425 = vadd.f32 %v313, %v424
    %v426 = vpop.f32.mrb[0].mxu0
    %427 = vmatprep.mubr.bf16.mxu0 0
    %428 = vmatmul.mubr.bf16.gmra.mrb[0].mxu0 %v305
    %v429 = vpop.f32.mrb[0].mxu0
    %v430 = vadd.f32 %v313, %v429
    %v431 = vpop.f32.mrb[0].mxu0
    %v432 = vpop.f32.mrb[0].mxu0
    %v433 = vadd.f32 %v313, %v432
    %v434 = vpop.f32.mrb[0].mxu0
    %435 = vmatprep.mubr.bf16.mxu0 0
    %436 = vmatmul.mubr.bf16.gmra.mrb[0].mxu0 %v306
    %v437 = vpop.f32.mrb[0].mxu0
    %v438 = vadd.f32 %v313, %v437
    %v439 = vpop.f32.mrb[0].mxu0
    %v440 = vpop.f32.mrb[0].mxu0
    %v441 = vadd.f32 %v313, %v440
    %v442 = vpop.f32.mrb[0].mxu0
    %443 = vmatprep.mubr.bf16.mxu0 0
    %444 = vmatmul.mubr.bf16.gmra.mrb[0].mxu0 %v307
    %v445 = vpop.f32.mrb[0].mxu0
    %v446 = vadd.f32 %v313, %v445
    %v447 = vpop.f32.mrb[0].mxu0
    %v448 = vpop.f32.mrb[0].mxu0
    %v449 = vadd.f32 %v313, %v448
    %v450 = vpop.f32.mrb[0].mxu0
    %451 = vmatprep.mubr.bf16.mxu0 0
    %452 = vmatmul.mubr.bf16.gmra.mrb[0].mxu0 %v308
    %v453 = vpop.f32.mrb[0].mxu0
    %v454 = vadd.f32 %v313, %v453
    %v455 = vpop.f32.mrb[0].mxu0
    %v456 = vpop.f32.mrb[0].mxu0
    %v457 = vadd.f32 %v313, %v456
    %v458 = vpop.f32.mrb[0].mxu0
    %459 = vdwg.mxu0
    %v460 = vmax.f32 %v398, 0.0
    %v461 = vmax.f32 %v401, 0.0
    %v462 = vmax.f32 %v406, 0.0
    %v463 = vmax.f32 %v409, 0.0
    %v464 = vmax.f32 %v414, 0.0
    %v465 = vmax.f32 %v417, 0.0
    %v466 = vmax.f32 %v422, 0.0
    %v467 = vmax.f32 %v425, 0.0
    %v468 = vmax.f32 %v430, 0.0
    %v469 = vmax.f32 %v433, 0.0
    %v470 = vmax.f32 %v438, 0.0
    %v471 = vmax.f32 %v441, 0.0
    %v472 = vmax.f32 %v446, 0.0
    %v473 = vmax.f32 %v449, 0.0
    %v474 = vmax.f32 %v454, 0.0
    %v475 = vmax.f32 %v457, 0.0
    %v476 = vld [vmem:[#allocation8] sm:$0xf]
    %v477 = vld [vmem:[#allocation8 + $0x4] sm:$0xf]
    %v478 = vld [vmem:[#allocation8 + $0x8] sm:$0xf]
    %v479 = vld [vmem:[#allocation8 + $0xc] sm:$0xf]
    %v480 = vld [vmem:[#allocation8 + $0x10] sm:$0xf]
    %v481 = vld [vmem:[#allocation8 + $0x14] sm:$0xf]
    %v482 = vld [vmem:[#allocation8 + $0x18] sm:$0xf]
    %v483 = vld [vmem:[#allocation8 + $0x1c] sm:$0xf]
    %v484 = vld [vmem:[#allocation8 + $0x20] sm:$0xf]
    %v485 = vld [vmem:[#allocation8 + $0x24] sm:$0xf]
    %v486 = vld [vmem:[#allocation8 + $0x28] sm:$0xf]
    %v487 = vld [vmem:[#allocation8 + $0x2c] sm:$0xf]
    %v488 = vld [vmem:[#allocation8 + $0x30] sm:$0xf]
    %v489 = vld [vmem:[#allocation8 + $0x34] sm:$0xf]
    %v490 = vld [vmem:[#allocation8 + $0x38] sm:$0xf]
    %v491 = vld [vmem:[#allocation8 + $0x3c] sm:$0xf]
    %v492 = vld [vmem:[%s5] sm:$0x1]
    %v493 = vpack.c.bf16 %v461, %v460
    %v494 = vpack.c.bf16 %v463, %v462
    %v495 = vpack.c.bf16 %v465, %v464
    %v496 = vpack.c.bf16 %v467, %v466
    %v497 = vpack.c.bf16 %v469, %v468
    %v498 = vpack.c.bf16 %v471, %v470
    %v499 = vpack.c.bf16 %v473, %v472
    %v500 = vpack.c.bf16 %v475, %v474
    %501 = vmatprep.subr.bf16.mxu0 0
    %502 = vmatpush1.bf16.msra.mxu0 %v493
    %503 = vmatprep.subr.bf16.mxu0 0
    %504 = vmatpush1.bf16.msra.mxu0 %v494
    %505 = vmatprep.subr.bf16.mxu0 0
    %506 = vmatpush1.bf16.msra.mxu0 %v495
    %507 = vmatprep.subr.bf16.mxu0 0
    %508 = vmatpush1.bf16.msra.mxu0 %v496
    %509 = vmatprep.subr.bf16.mxu0 0
    %510 = vmatpush1.bf16.msra.mxu0 %v497
    %511 = vmatprep.subr.bf16.mxu0 0
    %512 = vmatpush1.bf16.msra.mxu0 %v498
    %513 = vmatprep.subr.bf16.mxu0 0
    %514 = vmatpush1.bf16.msra.mxu0 %v499
    %515 = vmatprep.subr.bf16.mxu0 0
    %516 = vmatpush1.bf16.msra.mxu0 %v500
    %517 = vmatprep.subr.bf16.mxu0 0
    %518 = vmatpush1.bf16.msra.mxu0 0
    %519 = vmatprep.subr.bf16.mxu0 0
    %520 = vmatpush1.bf16.msra.mxu0 0
    %521 = vmatprep.subr.bf16.mxu0 0
    %522 = vmatpush1.bf16.msra.mxu0 0
    %523 = vmatprep.subr.bf16.mxu0 0
    %524 = vmatpush1.bf16.msra.mxu0 0
    %525 = vmatprep.subr.bf16.mxu0 0
    %526 = vmatpush1.bf16.msra.mxu0 0
    %527 = vmatprep.subr.bf16.mxu0 0
    %528 = vmatpush1.bf16.msra.mxu0 0
    %529 = vmatprep.subr.bf16.mxu0 0
    %530 = vmatpush1.bf16.msra.mxu0 0
    %531 = vmatprep.subr.bf16.mxu0 0
    %532 = vmatpush1.bf16.msra.mxu0 0
    %533 = vmatprep.mubr.bf16.mxu0 0
    %534 = vmatmul.mubr.bf16.gmra.mrb[0].mxu0 %v188
    %v535 = vpop.f32.mrb[0].mxu0
    %v536 = vadd.f32 0.0, %v535
    %v537 = vpop.f32.mrb[0].mxu0
    %v538 = vpop.f32.mrb[0].mxu0
    %v539 = vadd.f32 0.0, %v538
    %v540 = vpop.f32.mrb[0].mxu0
    %541 = vmatprep.mubr.bf16.mxu0 0
    %542 = vmatmul.mubr.bf16.gmra.mrb[0].mxu0 %v189
    %v543 = vpop.f32.mrb[0].mxu0
    %v544 = vadd.f32 0.0, %v543
    %v545 = vpop.f32.mrb[0].mxu0
    %v546 = vpop.f32.mrb[0].mxu0
    %v547 = vadd.f32 0.0, %v546
    %v548 = vpop.f32.mrb[0].mxu0
    %549 = vmatprep.mubr.bf16.mxu0 0
    %550 = vmatmul.mubr.bf16.gmra.mrb[0].mxu0 %v190
    %v551 = vpop.f32.mrb[0].mxu0
    %v552 = vadd.f32 0.0, %v551
    %v553 = vpop.f32.mrb[0].mxu0
    %v554 = vpop.f32.mrb[0].mxu0
    %v555 = vadd.f32 0.0, %v554
    %v556 = vpop.f32.mrb[0].mxu0
    %557 = vmatprep.mubr.bf16.mxu0 0
    %558 = vmatmul.mubr.bf16.gmra.mrb[0].mxu0 %v191
    %v559 = vpop.f32.mrb[0].mxu0
    %v560 = vadd.f32 0.0, %v559
    %v561 = vpop.f32.mrb[0].mxu0
    %v562 = vpop.f32.mrb[0].mxu0
    %v563 = vadd.f32 0.0, %v562
    %v564 = vpop.f32.mrb[0].mxu0
    %565 = vmatprep.mubr.bf16.mxu0 0
    %566 = vmatmul.mubr.bf16.gmra.mrb[0].mxu0 %v192
    %v567 = vpop.f32.mrb[0].mxu0
    %v568 = vadd.f32 0.0, %v567
    %v569 = vpop.f32.mrb[0].mxu0
    %v570 = vpop.f32.mrb[0].mxu0
    %v571 = vadd.f32 0.0, %v570
    %v572 = vpop.f32.mrb[0].mxu0
    %573 = vmatprep.mubr.bf16.mxu0 0
    %574 = vmatmul.mubr.bf16.gmra.mrb[0].mxu0 %v193
    %v575 = vpop.f32.mrb[0].mxu0
    %v576 = vadd.f32 0.0, %v575
    %v577 = vpop.f32.mrb[0].mxu0
    %v578 = vpop.f32.mrb[0].mxu0
    %v579 = vadd.f32 0.0, %v578
    %v580 = vpop.f32.mrb[0].mxu0
    %581 = vmatprep.mubr.bf16.mxu0 0
    %582 = vmatmul.mubr.bf16.gmra.mrb[0].mxu0 %v194
    %v583 = vpop.f32.mrb[0].mxu0
    %v584 = vadd.f32 0.0, %v583
    %v585 = vpop.f32.mrb[0].mxu0
    %v586 = vpop.f32.mrb[0].mxu0
    %v587 = vadd.f32 0.0, %v586
    %v588 = vpop.f32.mrb[0].mxu0
    %589 = vmatprep.mubr.bf16.mxu0 0
    %590 = vmatmul.mubr.bf16.gmra.mrb[0].mxu0 %v195
    %v591 = vpop.f32.mrb[0].mxu0
    %v592 = vadd.f32 0.0, %v591
    %v593 = vpop.f32.mrb[0].mxu0
    %v594 = vpop.f32.mrb[0].mxu0
    %v595 = vadd.f32 0.0, %v594
    %v596 = vpop.f32.mrb[0].mxu0
    %597 = vdwg.mxu0
    %v598 = vpack.c.bf16 %v539, %v536
    %v599 = vpack.c.bf16 %v547, %v544
    %v600 = vpack.c.bf16 %v555, %v552
    %v601 = vpack.c.bf16 %v563, %v560
    %v602 = vpack.c.bf16 %v571, %v568
    %v603 = vpack.c.bf16 %v579, %v576
    %v604 = vpack.c.bf16 %v587, %v584
    %v605 = vpack.c.bf16 %v595, %v592
    %v607 = vlaneseq
    %v608 = vshrl.u32 %v607, 7
    %v609 = vsub.s32 0, %v608
    %v610 = vrot.slane %v492, %v609
    %v628 = vunpack.c.l.b16 %v476
    %v629 = vunpack.c.l.b16 %v477
    %v630 = vunpack.c.l.b16 %v478
    %v631 = vunpack.c.l.b16 %v479
    %v632 = vunpack.c.l.b16 %v480
    %v633 = vunpack.c.l.b16 %v481
    %v634 = vunpack.c.l.b16 %v482
    %v635 = vunpack.c.l.b16 %v483
    %v636 = vunpack.c.l.b16 %v484
    %v637 = vunpack.c.l.b16 %v485
    %v638 = vunpack.c.l.b16 %v486
    %v639 = vunpack.c.l.b16 %v487
    %v640 = vunpack.c.l.b16 %v488
    %v641 = vunpack.c.l.b16 %v489
    %v642 = vunpack.c.l.b16 %v490
    %v643 = vunpack.c.l.b16 %v491
    %v644 = vpack.c.b16 %v629, %v628
    %v645 = vpack.c.b16 %v631, %v630
    %v646 = vpack.c.b16 %v633, %v632
    %v647 = vpack.c.b16 %v635, %v634
    %v648 = vpack.c.b16 %v637, %v636
    %v649 = vpack.c.b16 %v639, %v638
    %v650 = vpack.c.b16 %v641, %v640
    %v651 = vpack.c.b16 %v643, %v642
    %660 = vmatprep.subr.bf16.mxu0 0
    %661 = vmatpush1.bf16.msra.mxu0 %v644
    %662 = vmatprep.subr.bf16.mxu0 0
    %663 = vmatpush1.bf16.msra.mxu0 %v645
    %664 = vmatprep.subr.bf16.mxu0 0
    %665 = vmatpush1.bf16.msra.mxu0 %v646
    %666 = vmatprep.subr.bf16.mxu0 0
    %667 = vmatpush1.bf16.msra.mxu0 %v647
    %668 = vmatprep.subr.bf16.mxu0 0
    %669 = vmatpush1.bf16.msra.mxu0 %v648
    %670 = vmatprep.subr.bf16.mxu0 0
    %671 = vmatpush1.bf16.msra.mxu0 %v649
    %672 = vmatprep.subr.bf16.mxu0 0
    %673 = vmatpush1.bf16.msra.mxu0 %v650
    %674 = vmatprep.subr.bf16.mxu0 0
    %675 = vmatpush1.bf16.msra.mxu0 %v651
    %676 = vmatprep.subr.bf16.mxu0 0
    %677 = vmatpush1.bf16.msra.mxu0 0
    %678 = vmatprep.subr.bf16.mxu0 0
    %679 = vmatpush1.bf16.msra.mxu0 0
    %680 = vmatprep.subr.bf16.mxu0 0
    %681 = vmatpush1.bf16.msra.mxu0 0
    %682 = vmatprep.subr.bf16.mxu0 0
    %683 = vmatpush1.bf16.msra.mxu0 0
    %684 = vmatprep.subr.bf16.mxu0 0
    %685 = vmatpush1.bf16.msra.mxu0 0
    %686 = vmatprep.subr.bf16.mxu0 0
    %687 = vmatpush1.bf16.msra.mxu0 0
    %688 = vmatprep.subr.bf16.mxu0 0
    %689 = vmatpush1.bf16.msra.mxu0 0
    %690 = vmatprep.subr.bf16.mxu0 0
    %691 = vmatpush1.bf16.msra.mxu0 0
    %692 = vmatprep.mubr.bf16.mxu0 0
    %693 = vmatmul.mubr.bf16.gmra.mrb[0].mxu0 %v598
    %v694 = vpop.f32.mrb[0].mxu0
    %v695 = vadd.f32 %v610, %v694
    %v696 = vpop.f32.mrb[0].mxu0
    %v697 = vpop.f32.mrb[0].mxu0
    %v698 = vadd.f32 %v610, %v697
    %v699 = vpop.f32.mrb[0].mxu0
    %700 = vmatprep.mubr.bf16.mxu0 0
    %701 = vmatmul.mubr.bf16.gmra.mrb[0].mxu0 %v599
    %v702 = vpop.f32.mrb[0].mxu0
    %v703 = vadd.f32 %v610, %v702
    %v704 = vpop.f32.mrb[0].mxu0
    %v705 = vpop.f32.mrb[0].mxu0
    %v706 = vadd.f32 %v610, %v705
    %v707 = vpop.f32.mrb[0].mxu0
    %708 = vmatprep.mubr.bf16.mxu0 0
    %709 = vmatmul.mubr.bf16.gmra.mrb[0].mxu0 %v600
    %v710 = vpop.f32.mrb[0].mxu0
    %v711 = vadd.f32 %v610, %v710
    %v712 = vpop.f32.mrb[0].mxu0
    %v713 = vpop.f32.mrb[0].mxu0
    %v714 = vadd.f32 %v610, %v713
    %v715 = vpop.f32.mrb[0].mxu0
    %716 = vmatprep.mubr.bf16.mxu0 0
    %717 = vmatmul.mubr.bf16.gmra.mrb[0].mxu0 %v601
    %v718 = vpop.f32.mrb[0].mxu0
    %v719 = vadd.f32 %v610, %v718
    %v720 = vpop.f32.mrb[0].mxu0
    %v721 = vpop.f32.mrb[0].mxu0
    %v722 = vadd.f32 %v610, %v721
    %v723 = vpop.f32.mrb[0].mxu0
    %724 = vmatprep.mubr.bf16.mxu0 0
    %725 = vmatmul.mubr.bf16.gmra.mrb[0].mxu0 %v602
    %v726 = vpop.f32.mrb[0].mxu0
    %v727 = vadd.f32 %v610, %v726
    %v728 = vpop.f32.mrb[0].mxu0
    %v729 = vpop.f32.mrb[0].mxu0
    %v730 = vadd.f32 %v610, %v729
    %v731 = vpop.f32.mrb[0].mxu0
    %732 = vmatprep.mubr.bf16.mxu0 0
    %733 = vmatmul.mubr.bf16.gmra.mrb[0].mxu0 %v603
    %v734 = vpop.f32.mrb[0].mxu0
    %v735 = vadd.f32 %v610, %v734
    %v736 = vpop.f32.mrb[0].mxu0
    %v737 = vpop.f32.mrb[0].mxu0
    %v738 = vadd.f32 %v610, %v737
    %v739 = vpop.f32.mrb[0].mxu0
    %740 = vmatprep.mubr.bf16.mxu0 0
    %741 = vmatmul.mubr.bf16.gmra.mrb[0].mxu0 %v604
    %v742 = vpop.f32.mrb[0].mxu0
    %v743 = vadd.f32 %v610, %v742
    %v744 = vpop.f32.mrb[0].mxu0
    %v745 = vpop.f32.mrb[0].mxu0
    %v746 = vadd.f32 %v610, %v745
    %v747 = vpop.f32.mrb[0].mxu0
    %748 = vmatprep.mubr.bf16.mxu0 0
    %749 = vmatmul.mubr.bf16.gmra.mrb[0].mxu0 %v605
    %v750 = vpop.f32.mrb[0].mxu0
    %v751 = vadd.f32 %v610, %v750
    %v752 = vpop.f32.mrb[0].mxu0
    %v753 = vpop.f32.mrb[0].mxu0
    %v754 = vadd.f32 %v610, %v753
    %v755 = vpop.f32.mrb[0].mxu0
    %756 = vdwg.mxu0
    %v757 = vmax.f32 %v695, 0.0
    %v758 = vmax.f32 %v698, 0.0
    %v759 = vmax.f32 %v703, 0.0
    %v760 = vmax.f32 %v706, 0.0
    %v761 = vmax.f32 %v711, 0.0
    %v762 = vmax.f32 %v714, 0.0
    %v763 = vmax.f32 %v719, 0.0
    %v764 = vmax.f32 %v722, 0.0
    %v765 = vmax.f32 %v727, 0.0
    %v766 = vmax.f32 %v730, 0.0
    %v767 = vmax.f32 %v735, 0.0
    %v768 = vmax.f32 %v738, 0.0
    %v769 = vmax.f32 %v743, 0.0
    %v770 = vmax.f32 %v746, 0.0
    %v771 = vmax.f32 %v751, 0.0
    %v772 = vmax.f32 %v754, 0.0
    %v773 = vld [vmem:[#allocation10] sm:$0xf]
    %v774 = vld [vmem:[#allocation10 + $0x4] sm:$0xf]
    %v775 = vld [vmem:[#allocation10 + $0x8] sm:$0xf]
    %v776 = vld [vmem:[#allocation10 + $0xc] sm:$0xf]
    %v777 = vld [vmem:[#allocation10 + $0x10] sm:$0xf]
    %v778 = vld [vmem:[#allocation10 + $0x14] sm:$0xf]
    %v779 = vld [vmem:[#allocation10 + $0x18] sm:$0xf]
    %v780 = vld [vmem:[#allocation10 + $0x1c] sm:$0xf]
    %v781 = vld [vmem:[#allocation10 + $0x20] sm:$0xf]
    %v782 = vld [vmem:[#allocation10 + $0x24] sm:$0xf]
    %v783 = vld [vmem:[#allocation10 + $0x28] sm:$0xf]
    %v784 = vld [vmem:[#allocation10 + $0x2c] sm:$0xf]
    %v785 = vld [vmem:[#allocation10 + $0x30] sm:$0xf]
    %v786 = vld [vmem:[#allocation10 + $0x34] sm:$0xf]
    %v787 = vld [vmem:[#allocation10 + $0x38] sm:$0xf]
    %v788 = vld [vmem:[#allocation10 + $0x3c] sm:$0xf]
    %v789 = vld [vmem:[%s7] sm:$0x1]
    %v790 = vpack.c.bf16 %v758, %v757
    %v791 = vpack.c.bf16 %v760, %v759
    %v792 = vpack.c.bf16 %v762, %v761
    %v793 = vpack.c.bf16 %v764, %v763
    %v794 = vpack.c.bf16 %v766, %v765
    %v795 = vpack.c.bf16 %v768, %v767
    %v796 = vpack.c.bf16 %v770, %v769
    %v797 = vpack.c.bf16 %v772, %v771
    %798 = vmatprep.subr.bf16.mxu0 0
    %799 = vmatpush1.bf16.msra.mxu0 %v790
    %800 = vmatprep.subr.bf16.mxu0 0
    %801 = vmatpush1.bf16.msra.mxu0 %v791
    %802 = vmatprep.subr.bf16.mxu0 0
    %803 = vmatpush1.bf16.msra.mxu0 %v792
    %804 = vmatprep.subr.bf16.mxu0 0
    %805 = vmatpush1.bf16.msra.mxu0 %v793
    %806 = vmatprep.subr.bf16.mxu0 0
    %807 = vmatpush1.bf16.msra.mxu0 %v794
    %808 = vmatprep.subr.bf16.mxu0 0
    %809 = vmatpush1.bf16.msra.mxu0 %v795
    %810 = vmatprep.subr.bf16.mxu0 0
    %811 = vmatpush1.bf16.msra.mxu0 %v796
    %812 = vmatprep.subr.bf16.mxu0 0
    %813 = vmatpush1.bf16.msra.mxu0 %v797
    %814 = vmatprep.subr.bf16.mxu0 0
    %815 = vmatpush1.bf16.msra.mxu0 0
    %816 = vmatprep.subr.bf16.mxu0 0
    %817 = vmatpush1.bf16.msra.mxu0 0
    %818 = vmatprep.subr.bf16.mxu0 0
    %819 = vmatpush1.bf16.msra.mxu0 0
    %820 = vmatprep.subr.bf16.mxu0 0
    %821 = vmatpush1.bf16.msra.mxu0 0
    %822 = vmatprep.subr.bf16.mxu0 0
    %823 = vmatpush1.bf16.msra.mxu0 0
    %824 = vmatprep.subr.bf16.mxu0 0
    %825 = vmatpush1.bf16.msra.mxu0 0
    %826 = vmatprep.subr.bf16.mxu0 0
    %827 = vmatpush1.bf16.msra.mxu0 0
    %828 = vmatprep.subr.bf16.mxu0 0
    %829 = vmatpush1.bf16.msra.mxu0 0
    %830 = vmatprep.mubr.bf16.mxu0 0
    %831 = vmatmul.mubr.bf16.gmra.mrb[0].mxu0 %v188
    %v832 = vpop.f32.mrb[0].mxu0
    %v833 = vadd.f32 0.0, %v832
    %v834 = vpop.f32.mrb[0].mxu0
    %v835 = vpop.f32.mrb[0].mxu0
    %v836 = vadd.f32 0.0, %v835
    %v837 = vpop.f32.mrb[0].mxu0
    %838 = vmatprep.mubr.bf16.mxu0 0
    %839 = vmatmul.mubr.bf16.gmra.mrb[0].mxu0 %v189
    %v840 = vpop.f32.mrb[0].mxu0
    %v841 = vadd.f32 0.0, %v840
    %v842 = vpop.f32.mrb[0].mxu0
    %v843 = vpop.f32.mrb[0].mxu0
    %v844 = vadd.f32 0.0, %v843
    %v845 = vpop.f32.mrb[0].mxu0
    %846 = vmatprep.mubr.bf16.mxu0 0
    %847 = vmatmul.mubr.bf16.gmra.mrb[0].mxu0 %v190
    %v848 = vpop.f32.mrb[0].mxu0
    %v849 = vadd.f32 0.0, %v848
    %v850 = vpop.f32.mrb[0].mxu0
    %v851 = vpop.f32.mrb[0].mxu0
    %v852 = vadd.f32 0.0, %v851
    %v853 = vpop.f32.mrb[0].mxu0
    %854 = vmatprep.mubr.bf16.mxu0 0
    %855 = vmatmul.mubr.bf16.gmra.mrb[0].mxu0 %v191
    %v856 = vpop.f32.mrb[0].mxu0
    %v857 = vadd.f32 0.0, %v856
    %v858 = vpop.f32.mrb[0].mxu0
    %v859 = vpop.f32.mrb[0].mxu0
    %v860 = vadd.f32 0.0, %v859
    %v861 = vpop.f32.mrb[0].mxu0
    %862 = vmatprep.mubr.bf16.mxu0 0
    %863 = vmatmul.mubr.bf16.gmra.mrb[0].mxu0 %v192
    %v864 = vpop.f32.mrb[0].mxu0
    %v865 = vadd.f32 0.0, %v864
    %v866 = vpop.f32.mrb[0].mxu0
    %v867 = vpop.f32.mrb[0].mxu0
    %v868 = vadd.f32 0.0, %v867
    %v869 = vpop.f32.mrb[0].mxu0
    %870 = vmatprep.mubr.bf16.mxu0 0
    %871 = vmatmul.mubr.bf16.gmra.mrb[0].mxu0 %v193
    %v872 = vpop.f32.mrb[0].mxu0
    %v873 = vadd.f32 0.0, %v872
    %v874 = vpop.f32.mrb[0].mxu0
    %v875 = vpop.f32.mrb[0].mxu0
    %v876 = vadd.f32 0.0, %v875
    %v877 = vpop.f32.mrb[0].mxu0
    %878 = vmatprep.mubr.bf16.mxu0 0
    %879 = vmatmul.mubr.bf16.gmra.mrb[0].mxu0 %v194
    %v880 = vpop.f32.mrb[0].mxu0
    %v881 = vadd.f32 0.0, %v880
    %v882 = vpop.f32.mrb[0].mxu0
    %v883 = vpop.f32.mrb[0].mxu0
    %v884 = vadd.f32 0.0, %v883
    %v885 = vpop.f32.mrb[0].mxu0
    %886 = vmatprep.mubr.bf16.mxu0 0
    %887 = vmatmul.mubr.bf16.gmra.mrb[0].mxu0 %v195
    %v888 = vpop.f32.mrb[0].mxu0
    %v889 = vadd.f32 0.0, %v888
    %v890 = vpop.f32.mrb[0].mxu0
    %v891 = vpop.f32.mrb[0].mxu0
    %v892 = vadd.f32 0.0, %v891
    %v893 = vpop.f32.mrb[0].mxu0
    %894 = vdwg.mxu0
    %v895 = vpack.c.bf16 %v836, %v833
    %v896 = vpack.c.bf16 %v844, %v841
    %v897 = vpack.c.bf16 %v852, %v849
    %v898 = vpack.c.bf16 %v860, %v857
    %v899 = vpack.c.bf16 %v868, %v865
    %v900 = vpack.c.bf16 %v876, %v873
    %v901 = vpack.c.bf16 %v884, %v881
    %v902 = vpack.c.bf16 %v892, %v889
    %v904 = vlaneseq
    %v905 = vshrl.u32 %v904, 7
    %v906 = vsub.s32 0, %v905
    %v907 = vrot.slane %v789, %v906
    %v925 = vunpack.c.l.b16 %v773
    %v926 = vunpack.c.l.b16 %v774
    %v927 = vunpack.c.l.b16 %v775
    %v928 = vunpack.c.l.b16 %v776
    %v929 = vunpack.c.l.b16 %v777
    %v930 = vunpack.c.l.b16 %v778
    %v931 = vunpack.c.l.b16 %v779
    %v932 = vunpack.c.l.b16 %v780
    %v933 = vunpack.c.l.b16 %v781
    %v934 = vunpack.c.l.b16 %v782
    %v935 = vunpack.c.l.b16 %v783
    %v936 = vunpack.c.l.b16 %v784
    %v937 = vunpack.c.l.b16 %v785
    %v938 = vunpack.c.l.b16 %v786
    %v939 = vunpack.c.l.b16 %v787
    %v940 = vunpack.c.l.b16 %v788
    %v941 = vpack.c.b16 %v926, %v925
    %v942 = vpack.c.b16 %v928, %v927
    %v943 = vpack.c.b16 %v930, %v929
    %v944 = vpack.c.b16 %v932, %v931
    %v945 = vpack.c.b16 %v934, %v933
    %v946 = vpack.c.b16 %v936, %v935
    %v947 = vpack.c.b16 %v938, %v937
    %v948 = vpack.c.b16 %v940, %v939
    %957 = vmatprep.subr.bf16.mxu0 0
    %958 = vmatpush1.bf16.msra.mxu0 %v941
    %959 = vmatprep.subr.bf16.mxu0 0
    %960 = vmatpush1.bf16.msra.mxu0 %v942
    %961 = vmatprep.subr.bf16.mxu0 0
    %962 = vmatpush1.bf16.msra.mxu0 %v943
    %963 = vmatprep.subr.bf16.mxu0 0
    %964 = vmatpush1.bf16.msra.mxu0 %v944
    %965 = vmatprep.subr.bf16.mxu0 0
    %966 = vmatpush1.bf16.msra.mxu0 %v945
    %967 = vmatprep.subr.bf16.mxu0 0
    %968 = vmatpush1.bf16.msra.mxu0 %v946
    %969 = vmatprep.subr.bf16.mxu0 0
    %970 = vmatpush1.bf16.msra.mxu0 %v947
    %971 = vmatprep.subr.bf16.mxu0 0
    %972 = vmatpush1.bf16.msra.mxu0 %v948
    %973 = vmatprep.subr.bf16.mxu0 0
    %974 = vmatpush1.bf16.msra.mxu0 0
    %975 = vmatprep.subr.bf16.mxu0 0
    %976 = vmatpush1.bf16.msra.mxu0 0
    %977 = vmatprep.subr.bf16.mxu0 0
    %978 = vmatpush1.bf16.msra.mxu0 0
    %979 = vmatprep.subr.bf16.mxu0 0
    %980 = vmatpush1.bf16.msra.mxu0 0
    %981 = vmatprep.subr.bf16.mxu0 0
    %982 = vmatpush1.bf16.msra.mxu0 0
    %983 = vmatprep.subr.bf16.mxu0 0
    %984 = vmatpush1.bf16.msra.mxu0 0
    %985 = vmatprep.subr.bf16.mxu0 0
    %986 = vmatpush1.bf16.msra.mxu0 0
    %987 = vmatprep.subr.bf16.mxu0 0
    %988 = vmatpush1.bf16.msra.mxu0 0
    %989 = vmatprep.mubr.bf16.mxu0 0
    %990 = vmatmul.mubr.bf16.gmra.mrb[0].mxu0 %v895
    %v991 = vpop.f32.mrb[0].mxu0
    %v992 = vadd.f32 %v907, %v991
    %v993 = vpop.f32.mrb[0].mxu0
    %v994 = vpop.f32.mrb[0].mxu0
    %v995 = vadd.f32 %v907, %v994
    %v996 = vpop.f32.mrb[0].mxu0
    %997 = vmatprep.mubr.bf16.mxu0 0
    %998 = vmatmul.mubr.bf16.gmra.mrb[0].mxu0 %v896
    %v999 = vpop.f32.mrb[0].mxu0
    %v1000 = vadd.f32 %v907, %v999
    %v1001 = vpop.f32.mrb[0].mxu0
    %v1002 = vpop.f32.mrb[0].mxu0
    %v1003 = vadd.f32 %v907, %v1002
    %v1004 = vpop.f32.mrb[0].mxu0
    %1005 = vmatprep.mubr.bf16.mxu0 0
    %1006 = vmatmul.mubr.bf16.gmra.mrb[0].mxu0 %v897
    %v1007 = vpop.f32.mrb[0].mxu0
    %v1008 = vadd.f32 %v907, %v1007
    %v1009 = vpop.f32.mrb[0].mxu0
    %v1010 = vpop.f32.mrb[0].mxu0
    %v1011 = vadd.f32 %v907, %v1010
    %v1012 = vpop.f32.mrb[0].mxu0
    %1013 = vmatprep.mubr.bf16.mxu0 0
    %1014 = vmatmul.mubr.bf16.gmra.mrb[0].mxu0 %v898
    %v1015 = vpop.f32.mrb[0].mxu0
    %v1016 = vadd.f32 %v907, %v1015
    %v1017 = vpop.f32.mrb[0].mxu0
    %v1018 = vpop.f32.mrb[0].mxu0
    %v1019 = vadd.f32 %v907, %v1018
    %v1020 = vpop.f32.mrb[0].mxu0
    %1021 = vmatprep.mubr.bf16.mxu0 0
    %1022 = vmatmul.mubr.bf16.gmra.mrb[0].mxu0 %v899
    %v1023 = vpop.f32.mrb[0].mxu0
    %v1024 = vadd.f32 %v907, %v1023
    %v1025 = vpop.f32.mrb[0].mxu0
    %v1026 = vpop.f32.mrb[0].mxu0
    %v1027 = vadd.f32 %v907, %v1026
    %v1028 = vpop.f32.mrb[0].mxu0
    %1029 = vmatprep.mubr.bf16.mxu0 0
    %1030 = vmatmul.mubr.bf16.gmra.mrb[0].mxu0 %v900
    %v1031 = vpop.f32.mrb[0].mxu0
    %v1032 = vadd.f32 %v907, %v1031
    %v1033 = vpop.f32.mrb[0].mxu0
    %v1034 = vpop.f32.mrb[0].mxu0
    %v1035 = vadd.f32 %v907, %v1034
    %v1036 = vpop.f32.mrb[0].mxu0
    %1037 = vmatprep.mubr.bf16.mxu0 0
    %1038 = vmatmul.mubr.bf16.gmra.mrb[0].mxu0 %v901
    %v1039 = vpop.f32.mrb[0].mxu0
    %v1040 = vadd.f32 %v907, %v1039
    %v1041 = vpop.f32.mrb[0].mxu0
    %v1042 = vpop.f32.mrb[0].mxu0
    %v1043 = vadd.f32 %v907, %v1042
    %v1044 = vpop.f32.mrb[0].mxu0
    %1045 = vmatprep.mubr.bf16.mxu0 0
    %1046 = vmatmul.mubr.bf16.gmra.mrb[0].mxu0 %v902
    %v1047 = vpop.f32.mrb[0].mxu0
    %v1048 = vadd.f32 %v907, %v1047
    %v1049 = vpop.f32.mrb[0].mxu0
    %v1050 = vpop.f32.mrb[0].mxu0
    %v1051 = vadd.f32 %v907, %v1050
    %v1052 = vpop.f32.mrb[0].mxu0
    %1053 = vdwg.mxu0
    %1054 = vst [vmem:[#allocation11] sm:$0xff] %v992
    %1055 = vst [vmem:[#allocation11 + $0x8] sm:$0xff] %v995
    %1056 = vst [vmem:[#allocation11 + $0x10] sm:$0xff] %v1000
    %1057 = vst [vmem:[#allocation11 + $0x18] sm:$0xff] %v1003
    %1058 = vst [vmem:[#allocation11 + $0x20] sm:$0xff] %v1008
    %1059 = vst [vmem:[#allocation11 + $0x28] sm:$0xff] %v1011
    %1060 = vst [vmem:[#allocation11 + $0x30] sm:$0xff] %v1016
    %1061 = vst [vmem:[#allocation11 + $0x38] sm:$0xff] %v1019
    %1062 = vst [vmem:[#allocation11 + $0x40] sm:$0xff] %v1024
    %1063 = vst [vmem:[#allocation11 + $0x48] sm:$0xff] %v1027
    %1064 = vst [vmem:[#allocation11 + $0x50] sm:$0xff] %v1032
    %1065 = vst [vmem:[#allocation11 + $0x58] sm:$0xff] %v1035
    %1066 = vst [vmem:[#allocation11 + $0x60] sm:$0xff] %v1040
    %1067 = vst [vmem:[#allocation11 + $0x68] sm:$0xff] %v1043
    %1068 = vst [vmem:[#allocation11 + $0x70] sm:$0xff] %v1048
    %1069 = vst [vmem:[#allocation11 + $0x78] sm:$0xff] %v1051
    // Predicated region
    $region54: #{tpu_custom_call.1} parent=1 // pred_check
      _
    $region55: #{tpu_custom_call.1} parent=1 // pred_check_branch
      %1071 = sbr.rel (0) target = $region57
    $region56: #{tpu_custom_call.1} parent=1 // pred_region
      %s1073 = ssub.s32 2048, 2048
      %1074 = vsyncadd [#allocation4], %s1073
      %s1075 = sshll.u32 [#allocation11], 4
      %s1076 = int_to_ptr.vmem [resolvable:$true] %s1075
      %1081 = dma.vmem_to_hbm [thread:$0]  %s1076, 2048, %s8, [#allocation4], 128, 128, 8
    $region57: #{tpu_custom_call.1} parent=1 // pred_fallthru
      _
    // Predicated region
    $region58: #{tpu_custom_call.1} parent=1 // pred_check
      _
    $region59: #{tpu_custom_call.1} parent=1 // pred_check_branch
      %1083 = sbr.rel (0) target = $region61
    $region60: #{tpu_custom_call.1} parent=1 // pred_region
      %1084 = dma.done [#allocation4], 2048
    $region61: #{tpu_custom_call.1} parent=1 // pred_fallthru
      _
    %1085 = vsyncpa [#allocation3], 1
    %1086 = vsyncpa [#allocation6], 1
    %1087 = vsyncpa [#allocation9], 1
    %1088 = vsyncpa [#allocation4], 1

</llo_original>
